<compile_context>
chip_gen: v7x
topology: tpu7x:2x2x1
jax: 0.10.0
libtpu: 0.0.40
codegen_flags: <defaults>
</compile_context>

<pallas_src>
import functools

import jax
import jax.numpy as jnp
from jax.experimental import pallas as pl
from jax.experimental.pallas import tpu as pltpu


# --------------------------------------------------------------------------
# Kernel
# --------------------------------------------------------------------------
def _ffn_kernel(x_ref, w1_ref, b1_ref, w2_ref, b2_ref, g_ref, beta_ref,
                o_ref, acc_ref, *, eps, mxu_dtype):
    f = pl.program_id(1)

    @pl.when(f == 0)
    def _():
        acc_ref[...] = jnp.zeros_like(acc_ref)

    # Row tile in its stored dtype (f32 residual precision is preserved below).
    x = x_ref[...]
    xm = x.astype(mxu_dtype)                      # bf16 operands for the MXU

    # linear1 chunk + bias + ReLU, f32 accumulation on the MXU.
    h = jnp.dot(xm, w1_ref[...], preferred_element_type=jnp.float32)
    h = jnp.maximum(h + b1_ref[...].astype(jnp.float32), 0.0)
    # Materialize the hidden tile once, directly in the second-matmul dtype
    # (avoids keeping both an f32 and a bf16 copy of the (TM, TF) tile live).
    h = h.astype(w2_ref.dtype)

    # linear2 chunk, accumulated over the F axis into f32 VMEM scratch.
    acc_ref[...] += jnp.dot(h, w2_ref[...], preferred_element_type=jnp.float32)

    @pl.when(f == pl.num_programs(1) - 1)
    def _():
        # Residual + bias2 + LayerNorm (biased variance, eps, affine) in f32.
        z = x.astype(jnp.float32) + acc_ref[...] + b2_ref[...].astype(jnp.float32)
        mean = jnp.mean(z, axis=-1, keepdims=True)
        zc = z - mean
        var = jnp.mean(zc * zc, axis=-1, keepdims=True)
        zn = zc * jax.lax.rsqrt(var + eps)
        out = zn * g_ref[...].astype(jnp.float32) + beta_ref[...].astype(jnp.float32)
        o_ref[...] = out.astype(o_ref.dtype)


# --------------------------------------------------------------------------
# Tiling / budgeting helpers
# --------------------------------------------------------------------------
def _round_up(x, m):
    return ((x + m - 1) // m) * m


def _tpu_budget_and_cores():
    """(usable VMEM budget in bytes, #TensorCores). Generation-aware."""
    cap = None
    n_tc = 1
    try:
        info = pltpu.get_tpu_info()
        cap = getattr(info, "vmem_capacity_bytes", None)
        for name in ("num_tensorcores", "tensorcores_per_chip", "num_cores"):
            v = getattr(info, name, None)
            if isinstance(v, int) and v > 0:
                n_tc = v
                break
    except Exception:
        pass
    if not cap:
        cap = 64 * 1024 * 1024      # conservative: v7x has the smallest VMEM
    # ~75% of capacity: leaves headroom for compiler-internal scratch/metadata
    # (=> ~96 MiB on 128 MiB v5e/v6e, ~48 MiB on 64 MiB v7x).
    return int(cap) * 3 // 4, n_tc


def _pick_tiles(N, D, F, x_isize, o_isize, w_isize, budget, n_tc):
    """Choose (tile_rows, tile_ff) under the VMEM budget."""
    # F tiling: keep W1/W2 fully resident when they fit in ~1/3 of the budget
    # (counting default double-buffering, NOT double-counted beyond that);
    # otherwise stream F chunks and accumulate into the (TM, D) f32 scratch.
    tf = F
    if 4 * D * F * w_isize > budget // 3:
        for cand in (2048, 1024, 512, 256):
            if F % cand == 0:
                tf = cand
                break
        else:
            tf = 512   # weights get zero-padded along F in the wrapper

    const_bytes = 4 * D * tf * w_isize + 2 * tf * w_isize + 6 * D * 4

    tm = 128
    for cand in (1024, 768, 512, 384, 256, 128):
        per_rows = (2 * cand * D * x_isize          # x rows, double-buffered
                    + 2 * cand * D * o_isize        # out rows, double-buffered
                    + cand * D * 4                  # f32 accumulator scratch
                    + cand * tf * (4 + w_isize))    # f32 dot result + cast hidden
        if const_bytes + per_rows <= budget:
            tm = cand
            break

    # Tiny inputs: a single block rounded to the activation sublane multiple
    # (8 for f32, 16 for bf16); bigger inputs keep MXU-friendly 128 alignment.
    sub = max(8, 32 // x_isize)
    if N < 128:
        tm = _round_up(N, sub)
    else:
        tm = min(tm, _round_up(N, 128))

    # Multi-TensorCore chips (v7x): ensure the 'parallel' row axis has at
    # least n_tc steps so both cores get work; skipped on 1-TC chips where it
    # would only add per-step overhead.
    if n_tc > 1 and N >= n_tc * 128 and pl.cdiv(N, tm) < n_tc:
        tm = max(128, _round_up(pl.cdiv(N, n_tc), 128))

    return tm, tf


# --------------------------------------------------------------------------
# Wrapper
# --------------------------------------------------------------------------
def ffn_layer_forward(tgt, w1, b1, w2, b2, ln_gamma, ln_beta, *, eps=1e-5,
                      mxu_dtype=jnp.bfloat16, tile_rows=None, tile_ff=None):
    """FFNLayer.forward_post. tgt: (seq, batch, d_model).
    Weights stored as (in, out) == torch weight.T.
    mxu_dtype: dtype fed to the MXU (default bf16); None keeps the input dtype.
    """
    S, B, D = tgt.shape
    F = w1.shape[1]
    N = S * B

    x = tgt.reshape(N, D)
    mxu = jnp.dtype(mxu_dtype) if mxu_dtype is not None else jnp.dtype(tgt.dtype)

    x_isize = jnp.dtype(tgt.dtype).itemsize
    o_isize = x_isize
    w_isize = mxu.itemsize

    budget, n_tc = _tpu_budget_and_cores()
    tm, tf = _pick_tiles(N, D, F, x_isize, o_isize, w_isize, budget, n_tc)
    if tile_rows is not None:
        tm = tile_rows
    if tile_ff is not None:
        tf = tile_ff

    # Cast weights once in the wrapper (halves weight DMA + VMEM for f32 params).
    w1c = w1.astype(mxu)
    w2c = w2.astype(mxu)
    b1_2d = b1.reshape(1, F)
    b2_2d = b2.reshape(1, D)
    g_2d = ln_gamma.reshape(1, D)
    beta_2d = ln_beta.reshape(1, D)

    # If the F tile does not divide dim_feedforward, zero-pad the (small)
    # weights along F: padded hidden units are exactly relu(0)=0 and the
    # padded W2 rows are 0, so results are unchanged. Activations are never
    # padded/copied — the ragged last row block is masked by Pallas.
    F_pad = _round_up(F, tf)
    if F_pad != F:
        w1c = jnp.pad(w1c, ((0, 0), (0, F_pad - F)))
        b1_2d = jnp.pad(b1_2d, ((0, 0), (0, F_pad - F)))
        w2c = jnp.pad(w2c, ((0, F_pad - F), (0, 0)))

    n_rows = pl.cdiv(N, tm)
    n_f = F_pad // tf

    # Advisory cost for XLA scheduling. Weights are re-streamed per row block
    # only when the F axis is tiled (n_f > 1); otherwise fetched once.
    w_passes = 1 if n_f == 1 else n_rows
    cost = pl.CostEstimate(
        flops=4 * N * D * F + 10 * N * D,
        transcendentals=N,
        bytes_accessed=int(N * D * (x_isize + o_isize)
                           + w_passes * 2 * D * F_pad * w_isize
                           + (F_pad + 3 * D) * 4),
    )

    row_spec = pl.BlockSpec((tm, D), lambda i, f: (i, 0))
    in_specs = [
        row_spec,                                       # x rows
        pl.BlockSpec((D, tf), lambda i, f: (0, f)),     # W1 chunk (in, out)
        pl.BlockSpec((1, tf), lambda i, f: (0, f)),     # b1 chunk
        pl.BlockSpec((tf, D), lambda i, f: (f, 0)),     # W2 chunk (in, out)
        pl.BlockSpec((1, D), lambda i, f: (0, 0)),      # b2
        pl.BlockSpec((1, D), lambda i, f: (0, 0)),      # LN gamma
        pl.BlockSpec((1, D), lambda i, f: (0, 0)),      # LN beta
    ]

    call = pl.pallas_call(
        functools.partial(_ffn_kernel, eps=eps, mxu_dtype=mxu),
        out_shape=jax.ShapeDtypeStruct((N, D), tgt.dtype),
        grid_spec=pltpu.PrefetchScalarGridSpec(
            num_scalar_prefetch=0,
            grid=(n_rows, n_f),
            in_specs=in_specs,
            out_specs=row_spec,
            scratch_shapes=[pltpu.VMEM((tm, D), jnp.float32)],
        ),
        compiler_params=pltpu.CompilerParams(
            dimension_semantics=("parallel", "arbitrary"),
            vmem_limit_bytes=int(budget)),
        cost_estimate=cost,
    )

    out = call(x, w1c, b1_2d, w2c, b2_2d, g_2d, beta_2d)
    return out.reshape(S, B, D)


# --------------------------------------------------------------------------
# Param init (matches FFNLayer._reset_parameters + nn.Linear/LayerNorm defaults)
# --------------------------------------------------------------------------
def _xavier_uniform(key, fan_in, fan_out, dtype=jnp.float32):
    bound = (6.0 / (fan_in + fan_out)) ** 0.5
    return jax.random.uniform(key, (fan_in, fan_out), dtype,
                              minval=-bound, maxval=bound)


def init_ffn_params(key, d_model, dim_feedforward, dtype=jnp.float32):
    k1, k2, k3, k4 = jax.random.split(key, 4)
    # Linear weights stored as (in, out) == PyTorch weight.T (xavier bound is
    # symmetric in fan_in/fan_out so the transpose is equivalent).
    w1 = _xavier_uniform(k1, d_model, dim_feedforward, dtype)
    w2 = _xavier_uniform(k2, dim_feedforward, d_model, dtype)
    # Biases keep nn.Linear default init: U(-1/sqrt(fan_in), 1/sqrt(fan_in)).
    bb1 = 1.0 / (d_model ** 0.5)
    bb2 = 1.0 / (dim_feedforward ** 0.5)
    b1 = jax.random.uniform(k3, (dim_feedforward,), dtype, -bb1, bb1)
    b2 = jax.random.uniform(k4, (d_model,), dtype, -bb2, bb2)
    # LayerNorm affine defaults.
    ln_gamma = jnp.ones((d_model,), dtype)
    ln_beta = jnp.zeros((d_model,), dtype)
    return w1, b1, w2, b2, ln_gamma, ln_beta


def ffn_layer_ref(tgt, w1, b1, w2, b2, g, beta, eps=1e-5):
    """Pure-JAX reference for correctness check."""
    h = jnp.maximum(tgt @ w1 + b1, 0.0)
    tgt2 = h @ w2 + b2
    z = tgt + tgt2
    mean = jnp.mean(z, axis=-1, keepdims=True)
    var = jnp.mean((z - mean) ** 2, axis=-1, keepdims=True)
    return (z - mean) * jax.lax.rsqrt(var + eps) * g + beta


# TODO(synk): gelu/glu activations, normalize_before=True (forward_pre) and
# use_layer_scale=True are not implemented; defaults of the module are covered.

if __name__ == "__main__":
    key = jax.random.PRNGKey(0)
    k_x, k_p, k_x2 = jax.random.split(key, 3)

    # Small shapes consistent with FFNLayer: (seq, batch, d_model).
    seq, batch, d_model, dim_feedforward = 8, 2, 32, 64

    tgt = jax.random.normal(k_x, (seq, batch, d_model), jnp.float32)
    params = init_ffn_params(k_p, d_model, dim_feedforward)
    ref = ffn_layer_ref(tgt, *params)

    # Default bf16-MXU path (f32 accumulation, f32 residual + LayerNorm).
    out = jax.block_until_ready(ffn_layer_forward(tgt, *params))
    assert out.shape == (seq, batch, d_model)
    assert jnp.allclose(out, ref, atol=5e-2, rtol=5e-2), "bf16 path mismatch"

    # Full-f32 path + ragged row count (13*3 = 39): exercises the cdiv grid
    # with a masked partial last row block (no wrapper-side padding copy).
    tgt2 = jax.random.normal(k_x2, (13, 3, d_model), jnp.float32)
    out2 = jax.block_until_ready(ffn_layer_forward(tgt2, *params, mxu_dtype=None))
    ref2 = ffn_layer_ref(tgt2, *params)
    assert out2.shape == (13, 3, d_model)
    assert jnp.allclose(out2, ref2, atol=1e-2, rtol=1e-2), "f32 path mismatch"

    print("KERNEL_OK")
</pallas_src>

<mosaic_0001>
module attributes {stable_mosaic.version = 11 : i64} {
  func.func @_ffn_kernel(%arg0: i32, %arg1: i32, %arg2: memref<16x32xf32, #tpu.memory_space<vmem>>, %arg3: memref<32x64xbf16, #tpu.memory_space<vmem>>, %arg4: memref<1x64xf32, #tpu.memory_space<vmem>>, %arg5: memref<64x32xbf16, #tpu.memory_space<vmem>>, %arg6: memref<1x32xf32, #tpu.memory_space<vmem>>, %arg7: memref<1x32xf32, #tpu.memory_space<vmem>>, %arg8: memref<1x32xf32, #tpu.memory_space<vmem>>, %arg9: memref<16x32xf32, #tpu.memory_space<vmem>>, %arg10: memref<16x32xf32, #tpu.memory_space<vmem>>) attributes {dimension_semantics = [#tpu.dimension_semantics<parallel>, #tpu.dimension_semantics<arbitrary>], iteration_bounds = array<i64: 1, 1>, scalar_prefetch = 0 : i64, scratch_operands = 1 : i64, tpu.core_type = #tpu.core_type<tc>, window_params = [{transform_indices = @transform_0, window_bounds = array<i64: 16, 32>}, {transform_indices = @transform_1, window_bounds = array<i64: 32, 64>}, {transform_indices = @transform_2, window_bounds = array<i64: 1, 64>}, {transform_indices = @transform_3, window_bounds = array<i64: 64, 32>}, {pipeline_mode = #tpu.pipeline_mode<synchronous>, transform_indices = @transform_4, window_bounds = array<i64: 1, 32>}, {pipeline_mode = #tpu.pipeline_mode<synchronous>, transform_indices = @transform_5, window_bounds = array<i64: 1, 32>}, {pipeline_mode = #tpu.pipeline_mode<synchronous>, transform_indices = @transform_6, window_bounds = array<i64: 1, 32>}, {transform_indices = @transform_7, window_bounds = array<i64: 16, 32>}]} {
    %c0_i32 = arith.constant 0 : i32
    %0 = arith.cmpi eq, %arg1, %c0_i32 : i32
    %1 = arith.extui %0 : i1 to i32
    %c0_i32_0 = arith.constant 0 : i32
    %2 = arith.cmpi ne, %1, %c0_i32_0 : i32
    scf.if %2 {
      %cst_16 = arith.constant 0.000000e+00 : f32
      %21 = vector.broadcast %cst_16 : f32 to vector<16x32xf32>
      %c0_17 = arith.constant 0 : index
      %c0_18 = arith.constant 0 : index
      %22 = vector.load %arg10[%c0_17, %c0_18] : memref<16x32xf32, #tpu.memory_space<vmem>>, vector<16x32xf32>
      tpu.vector_store %arg10[%c0_17, %c0_18], %21 {strides = array<i32>} : memref<16x32xf32, #tpu.memory_space<vmem>>, vector<16x32xf32>,
    } else {
    }
    %c0 = arith.constant 0 : index
    %c0_1 = arith.constant 0 : index
    %3 = vector.load %arg2[%c0, %c0_1] : memref<16x32xf32, #tpu.memory_space<vmem>>, vector<16x32xf32>
    %4 = arith.truncf %3 : vector<16x32xf32> to vector<16x32xbf16>
    %c0_2 = arith.constant 0 : index
    %c0_3 = arith.constant 0 : index
    %5 = vector.load %arg3[%c0_2, %c0_3] : memref<32x64xbf16, #tpu.memory_space<vmem>>, vector<32x64xbf16>
    %cst = arith.constant dense<0.000000e+00> : vector<16x64xf32>
    %6 = tpu.matmul %4, %5, %cst {dimension_numbers = #tpu.dot_dimension_numbers<[1], [0], [0], [1], [0, 0, 1, 1], [], []>} : vector<16x32xbf16>, vector<32x64xbf16>, vector<16x64xf32> -> vector<16x64xf32>
    %c0_4 = arith.constant 0 : index
    %c0_5 = arith.constant 0 : index
    %7 = vector.load %arg4[%c0_4, %c0_5] : memref<1x64xf32, #tpu.memory_space<vmem>>, vector<1x64xf32>
    %8 = vector.broadcast %7 : vector<1x64xf32> to vector<16x64xf32>
    %9 = arith.addf %6, %8 : vector<16x64xf32>
    %cst_6 = arith.constant 0.000000e+00 : f32
    %10 = vector.broadcast %cst_6 : f32 to vector<16x64xf32>
    %11 = arith.maximumf %9, %10 : vector<16x64xf32>
    %12 = arith.truncf %11 : vector<16x64xf32> to vector<16x64xbf16>
    %c0_7 = arith.constant 0 : index
    %c0_8 = arith.constant 0 : index
    %13 = vector.load %arg10[%c0_7, %c0_8] : memref<16x32xf32, #tpu.memory_space<vmem>>, vector<16x32xf32>
    %c0_9 = arith.constant 0 : index
    %c0_10 = arith.constant 0 : index
    %14 = vector.load %arg5[%c0_9, %c0_10] : memref<64x32xbf16, #tpu.memory_space<vmem>>, vector<64x32xbf16>
    %cst_11 = arith.constant dense<0.000000e+00> : vector<16x32xf32>
    %15 = tpu.matmul %12, %14, %cst_11 {dimension_numbers = #tpu.dot_dimension_numbers<[1], [0], [0], [1], [0, 0, 1, 1], [], []>} : vector<16x64xbf16>, vector<64x32xbf16>, vector<16x32xf32> -> vector<16x32xf32>
    %16 = arith.addf %13, %15 : vector<16x32xf32>
    %c0_12 = arith.constant 0 : index
    %c0_13 = arith.constant 0 : index
    %17 = vector.load %arg10[%c0_12, %c0_13] : memref<16x32xf32, #tpu.memory_space<vmem>>, vector<16x32xf32>
    tpu.vector_store %arg10[%c0_12, %c0_13], %16 {strides = array<i32>} : memref<16x32xf32, #tpu.memory_space<vmem>>, vector<16x32xf32>,
    %c0_i32_14 = arith.constant 0 : i32
    %18 = arith.cmpi eq, %arg1, %c0_i32_14 : i32
    %19 = arith.extui %18 : i1 to i32
    %c0_i32_15 = arith.constant 0 : i32
    %20 = arith.cmpi ne, %19, %c0_i32_15 : i32
    scf.if %20 {
      %c0_16 = arith.constant 0 : index
      %c0_17 = arith.constant 0 : index
      %21 = vector.load %arg10[%c0_16, %c0_17] : memref<16x32xf32, #tpu.memory_space<vmem>>, vector<16x32xf32>
      %22 = arith.addf %3, %21 : vector<16x32xf32>
      %c0_18 = arith.constant 0 : index
      %c0_19 = arith.constant 0 : index
      %23 = vector.load %arg6[%c0_18, %c0_19] : memref<1x32xf32, #tpu.memory_space<vmem>>, vector<1x32xf32>
      %24 = vector.broadcast %23 : vector<1x32xf32> to vector<16x32xf32>
      %25 = arith.addf %22, %24 : vector<16x32xf32>
      %cst_20 = arith.constant dense<0.000000e+00> : vector<16xf32>
      %26 = vector.multi_reduction <add>, %25, %cst_20 [1] : vector<16x32xf32> to vector<16xf32>
      %27 = vector.shape_cast %26 : vector<16xf32> to vector<16x1xf32>
      %cst_21 = arith.constant 3.200000e+01 : f32
      %28 = vector.broadcast %cst_21 : f32 to vector<16x1xf32>
      %29 = arith.divf %27, %28 : vector<16x1xf32>
      %30 = vector.broadcast %29 : vector<16x1xf32> to vector<16x32xf32>
      %31 = arith.subf %25, %30 : vector<16x32xf32>
      %32 = arith.mulf %31, %31 : vector<16x32xf32>
      %cst_22 = arith.constant dense<0.000000e+00> : vector<16xf32>
      %33 = vector.multi_reduction <add>, %32, %cst_22 [1] : vector<16x32xf32> to vector<16xf32>
      %34 = vector.shape_cast %33 : vector<16xf32> to vector<16x1xf32>
      %cst_23 = arith.constant 3.200000e+01 : f32
      %35 = vector.broadcast %cst_23 : f32 to vector<16x1xf32>
      %36 = arith.divf %34, %35 : vector<16x1xf32>
      %cst_24 = arith.constant 9.99999974E-6 : f32
      %37 = vector.broadcast %cst_24 : f32 to vector<16x1xf32>
      %38 = arith.addf %36, %37 : vector<16x1xf32>
      %39 = math.rsqrt %38 : vector<16x1xf32>
      %40 = vector.broadcast %39 : vector<16x1xf32> to vector<16x32xf32>
      %41 = arith.mulf %31, %40 : vector<16x32xf32>
      %c0_25 = arith.constant 0 : index
      %c0_26 = arith.constant 0 : index
      %42 = vector.load %arg7[%c0_25, %c0_26] : memref<1x32xf32, #tpu.memory_space<vmem>>, vector<1x32xf32>
      %43 = vector.broadcast %42 : vector<1x32xf32> to vector<16x32xf32>
      %44 = arith.mulf %41, %43 : vector<16x32xf32>
      %c0_27 = arith.constant 0 : index
      %c0_28 = arith.constant 0 : index
      %45 = vector.load %arg8[%c0_27, %c0_28] : memref<1x32xf32, #tpu.memory_space<vmem>>, vector<1x32xf32>
      %46 = vector.broadcast %45 : vector<1x32xf32> to vector<16x32xf32>
      %47 = arith.addf %44, %46 : vector<16x32xf32>
      %c0_29 = arith.constant 0 : index
      %c0_30 = arith.constant 0 : index
      %48 = vector.load %arg9[%c0_29, %c0_30] : memref<16x32xf32, #tpu.memory_space<vmem>>, vector<16x32xf32>
      tpu.vector_store %arg9[%c0_29, %c0_30], %47 {strides = array<i32>} : memref<16x32xf32, #tpu.memory_space<vmem>>, vector<16x32xf32>,
    } else {
    }
    return
  }
  func.func @transform_0(%arg0: i32, %arg1: i32) -> (i32, i32) {
    %c0_i32 = arith.constant 0 : i32
    %c0_i32_0 = arith.constant 0 : i32
    return %arg0, %c0_i32 : i32, i32
  }
  func.func @transform_1(%arg0: i32, %arg1: i32) -> (i32, i32) {
    %c0_i32 = arith.constant 0 : i32
    %c0_i32_0 = arith.constant 0 : i32
    return %c0_i32, %arg1 : i32, i32
  }
  func.func @transform_2(%arg0: i32, %arg1: i32) -> (i32, i32) {
    %c0_i32 = arith.constant 0 : i32
    %c0_i32_0 = arith.constant 0 : i32
    return %c0_i32, %arg1 : i32, i32
  }
  func.func @transform_3(%arg0: i32, %arg1: i32) -> (i32, i32) {
    %c0_i32 = arith.constant 0 : i32
    %c0_i32_0 = arith.constant 0 : i32
    return %arg1, %c0_i32 : i32, i32
  }
  func.func @transform_4(%arg0: i32, %arg1: i32) -> (i32, i32) {
    %c0_i32 = arith.constant 0 : i32
    %c0_i32_0 = arith.constant 0 : i32
    %c0_i32_1 = arith.constant 0 : i32
    return %c0_i32, %c0_i32_0 : i32, i32
  }
  func.func @transform_5(%arg0: i32, %arg1: i32) -> (i32, i32) {
    %c0_i32 = arith.constant 0 : i32
    %c0_i32_0 = arith.constant 0 : i32
    %c0_i32_1 = arith.constant 0 : i32
    return %c0_i32, %c0_i32_0 : i32, i32
  }
  func.func @transform_6(%arg0: i32, %arg1: i32) -> (i32, i32) {
    %c0_i32 = arith.constant 0 : i32
    %c0_i32_0 = arith.constant 0 : i32
    %c0_i32_1 = arith.constant 0 : i32
    return %c0_i32, %c0_i32_0 : i32, i32
  }
  func.func @transform_7(%arg0: i32, %arg1: i32) -> (i32, i32) {
    %c0_i32 = arith.constant 0 : i32
    %c0_i32_0 = arith.constant 0 : i32
    return %arg0, %c0_i32 : i32, i32
  }
}

</mosaic_0001>

<llo_original>
// kernel: tpu_custom_call.1
$region0: #{tpu_custom_call.1}
  #allocation0 [shape = 'u32[]', space=smem, size = 0x4, offset = 0x4, fixed_abs, tag = 'smem constant byte address 0x4 - core index']
  #allocation1 [shape = 'u32[144,128]{1,0:T(1,128)}', space=vmem, size = 0x12000, scoped, tag = 'internal scratch']
  #allocation2 [shape = 'f32[16,32]{1,0:T(8,128)}', space=vmem, size = 0x2000, scoped, tag = 'scratch operand']
  %s0 = inlined_call_operand.vmem [shape: f32[16,32], index: 0, kind: input, shape index: {}]
  %s1 = inlined_call_operand.vmem [shape: bf16[32,64], index: 1, kind: input, shape index: {}]
  %s2 = inlined_call_operand.vmem [shape: f32[1,64], index: 2, kind: input, shape index: {}]
  %s3 = inlined_call_operand.vmem [shape: bf16[64,32], index: 3, kind: input, shape index: {}]
  %s4 = inlined_call_operand.vmem [shape: f32[1,32], index: 4, kind: input, shape index: {}]
  %s5 = inlined_call_operand.vmem [shape: f32[1,32], index: 5, kind: input, shape index: {}]
  %s6 = inlined_call_operand.vmem [shape: f32[1,32], index: 6, kind: input, shape index: {}]
  %s7 = inlined_call_operand.hbm [shape: f32[16,32], index: 7, kind: output, shape index: {}]
  %s8 = sld [smem:[#allocation0]]
  $region46: #{tpu_custom_call.1} parent=0
    _
  %s10 = ssub.s32 1, %s8
  %s11 = scalar_select 0, %s10, %s8
  $region1: #{tpu_custom_call.1} parent=0
    #allocation3 [shape = 'u8[8192]{0}', space=vmem, size = 0x2000, scoped, tag = 'output window, operand 0, single buffered']
    #allocation4 [shape = 's32[1]{0}', space=sflag, size = 0x4, scoped, tag = 'scoped memory for tpu_custom_call.1']
    %12 = vsyncpa [#allocation4], 0
    // Predicated region
    $region2: #{tpu_custom_call.1} parent=1 // pred_check
      _
    $region3: #{tpu_custom_call.1} parent=1 // pred_check_branch
      %14 = sbr.rel (0) target = $region5
    $region4: #{tpu_custom_call.1} parent=1 // pred_region
      _
    $region5: #{tpu_custom_call.1} parent=1 // pred_fallthru
      _
    // Predicated region
    $region6: #{tpu_custom_call.1} parent=1 // pred_check
      _
    $region7: #{tpu_custom_call.1} parent=1 // pred_check_branch
      %16 = sbr.rel (0) target = $region9
    $region8: #{tpu_custom_call.1} parent=1 // pred_region
      _
    $region9: #{tpu_custom_call.1} parent=1 // pred_fallthru
      _
    // Predicated region
    $region10: #{tpu_custom_call.1} parent=1 // pred_check
      _
    $region11: #{tpu_custom_call.1} parent=1 // pred_check_branch
      %18 = sbr.rel (0) target = $region13
    $region12: #{tpu_custom_call.1} parent=1 // pred_region
      _
    $region13: #{tpu_custom_call.1} parent=1 // pred_fallthru
      _
    // Predicated region
    $region14: #{tpu_custom_call.1} parent=1 // pred_check
      _
    $region15: #{tpu_custom_call.1} parent=1 // pred_check_branch
      %20 = sbr.rel (0) target = $region17
    $region16: #{tpu_custom_call.1} parent=1 // pred_region
      _
    $region17: #{tpu_custom_call.1} parent=1 // pred_fallthru
      _
    // Predicated region
    $region18: #{tpu_custom_call.1} parent=1 // pred_check
      _
    $region19: #{tpu_custom_call.1} parent=1 // pred_check_branch
      %22 = sbr.rel (0) target = $region21
    $region20: #{tpu_custom_call.1} parent=1 // pred_region
      _
    $region21: #{tpu_custom_call.1} parent=1 // pred_fallthru
      _
    // Predicated region
    $region22: #{tpu_custom_call.1} parent=1 // pred_check
      _
    $region23: #{tpu_custom_call.1} parent=1 // pred_check_branch
      %24 = sbr.rel (0) target = $region25
    $region24: #{tpu_custom_call.1} parent=1 // pred_region
      _
    $region25: #{tpu_custom_call.1} parent=1 // pred_fallthru
      _
    // Predicated region
    $region26: #{tpu_custom_call.1} parent=1 // pred_check
      _
    $region27: #{tpu_custom_call.1} parent=1 // pred_check_branch
      %26 = sbr.rel (0) target = $region29
    $region28: #{tpu_custom_call.1} parent=1 // pred_region
      _
    $region29: #{tpu_custom_call.1} parent=1 // pred_fallthru
      _
    %p28 = scmp.eq.s32.totalorder 0, 0
    // Predicated region
    $region30: #{tpu_custom_call.1} parent=1 // pred_check
      %p29 = pneg %p28
    $region31: #{tpu_custom_call.1} parent=1 // pred_check_branch
      %31 = sbr.rel (%p29) target = $region33
    $region32: #{tpu_custom_call.1} parent=1 // pred_region
      %vm32 = vcmask 261120
      %33 = vst.msk [vmem:[#allocation2] sm:$0xff] %vm32, 0.0
      %34 = vst.msk [vmem:[#allocation2 + $0x8] sm:$0xff] %vm32, 0.0
    $region33: #{tpu_custom_call.1} parent=1 // pred_fallthru
      _
    %v35 = vld [vmem:[%s0] sm:$0xff]
    %v36 = vld [vmem:[%s0 + $0x8] sm:$0xff]
    %v37 = vpack.c.bf16 %v36, %v35
    %v38 = vld [vmem:[%s1] sm:$0xf]
    %v39 = vld [vmem:[%s1 + $0x4] sm:$0xf]
    %v40 = vld [vmem:[%s1 + $0x8] sm:$0xf]
    %v41 = vld [vmem:[%s1 + $0xc] sm:$0xf]
    %v42 = vld [vmem:[%s2] sm:$0x1]
    %v44 = vlaneseq
    %v45 = vshrl.u32 %v44, 7
    %v46 = vsub.s32 0, %v45
    %v47 = vrot.slane %v42, %v46
    %v53 = vunpack.c.l.b16 %v38
    %v54 = vunpack.c.l.b16 %v39
    %v55 = vunpack.c.l.b16 %v40
    %v56 = vunpack.c.l.b16 %v41
    %v57 = vpack.c.b16 %v54, %v53
    %v58 = vpack.c.b16 %v56, %v55
    %vm61 = vcmask 261120
    %v63 = vsel %vm61, %v37, 0
    %65 = vmatprep.subr.bf16.mxu0 0
    %66 = vmatpush1.bf16.msra.mxu0 %v57
    %67 = vmatprep.subr.bf16.mxu0 0
    %68 = vmatpush1.bf16.msra.mxu0 %v58
    %69 = vmatprep.subr.bf16.mxu0 0
    %70 = vmatpush1.bf16.msra.mxu0 0
    %71 = vmatprep.subr.bf16.mxu0 0
    %72 = vmatpush1.bf16.msra.mxu0 0
    %73 = vmatprep.subr.bf16.mxu0 0
    %74 = vmatpush1.bf16.msra.mxu0 0
    %75 = vmatprep.subr.bf16.mxu0 0
    %76 = vmatpush1.bf16.msra.mxu0 0
    %77 = vmatprep.subr.bf16.mxu0 0
    %78 = vmatpush1.bf16.msra.mxu0 0
    %79 = vmatprep.subr.bf16.mxu0 0
    %80 = vmatpush1.bf16.msra.mxu0 0
    %81 = vmatprep.subr.bf16.mxu0 0
    %82 = vmatpush1.bf16.msra.mxu0 0
    %83 = vmatprep.subr.bf16.mxu0 0
    %84 = vmatpush1.bf16.msra.mxu0 0
    %85 = vmatprep.subr.bf16.mxu0 0
    %86 = vmatpush1.bf16.msra.mxu0 0
    %87 = vmatprep.subr.bf16.mxu0 0
    %88 = vmatpush1.bf16.msra.mxu0 0
    %89 = vmatprep.subr.bf16.mxu0 0
    %90 = vmatpush1.bf16.msra.mxu0 0
    %91 = vmatprep.subr.bf16.mxu0 0
    %92 = vmatpush1.bf16.msra.mxu0 0
    %93 = vmatprep.subr.bf16.mxu0 0
    %94 = vmatpush1.bf16.msra.mxu0 0
    %95 = vmatprep.subr.bf16.mxu0 0
    %96 = vmatpush1.bf16.msra.mxu0 0
    %97 = vmatprep.mubr.bf16.mxu0 0
    %98 = vmatmul.mubr.bf16.gmra.mrb[0].mxu0 %v63
    %v99 = vpop.f32.mrb[0].mxu0
    %v100 = vadd.f32 %v47, %v99
    %v101 = vpop.f32.mrb[0].mxu0
    %v102 = vpop.f32.mrb[0].mxu0
    %v103 = vadd.f32 %v47, %v102
    %v104 = vpop.f32.mrb[0].mxu0
    %105 = vdwg.mxu0
    %v106 = vmax.f32 %v100, 0.0
    %v107 = vmax.f32 %v103, 0.0
    %v108 = vpack.c.bf16 %v107, %v106
    %v109 = vld [vmem:[#allocation2] sm:$0xff]
    %v110 = vld [vmem:[#allocation2 + $0x8] sm:$0xff]
    %v111 = vld [vmem:[%s3] sm:$0xf]
    %v112 = vld [vmem:[%s3 + $0x4] sm:$0xf]
    %v113 = vld [vmem:[%s3 + $0x8] sm:$0xf]
    %v114 = vld [vmem:[%s3 + $0xc] sm:$0xf]
    %v115 = vld [vmem:[%s3 + $0x10] sm:$0xf]
    %v116 = vld [vmem:[%s3 + $0x14] sm:$0xf]
    %v117 = vld [vmem:[%s3 + $0x18] sm:$0xf]
    %v118 = vld [vmem:[%s3 + $0x1c] sm:$0xf]
    %v127 = vunpack.c.l.b16 %v111
    %v128 = vunpack.c.l.b16 %v112
    %v129 = vunpack.c.l.b16 %v113
    %v130 = vunpack.c.l.b16 %v114
    %v131 = vunpack.c.l.b16 %v115
    %v132 = vunpack.c.l.b16 %v116
    %v133 = vunpack.c.l.b16 %v117
    %v134 = vunpack.c.l.b16 %v118
    %v135 = vpack.c.b16 %v128, %v127
    %v136 = vpack.c.b16 %v130, %v129
    %v137 = vpack.c.b16 %v132, %v131
    %v138 = vpack.c.b16 %v134, %v133
    %vm143 = vcmask 523264
    %v145 = vsel %vm143, %v108, 0
    %147 = vmatprep.subr.bf16.mxu0 0
    %148 = vmatpush1.bf16.msra.mxu0 %v135
    %149 = vmatprep.subr.bf16.mxu0 0
    %150 = vmatpush1.bf16.msra.mxu0 %v136
    %151 = vmatprep.subr.bf16.mxu0 0
    %152 = vmatpush1.bf16.msra.mxu0 %v137
    %153 = vmatprep.subr.bf16.mxu0 0
    %154 = vmatpush1.bf16.msra.mxu0 %v138
    %155 = vmatprep.subr.bf16.mxu0 0
    %156 = vmatpush1.bf16.msra.mxu0 0
    %157 = vmatprep.subr.bf16.mxu0 0
    %158 = vmatpush1.bf16.msra.mxu0 0
    %159 = vmatprep.subr.bf16.mxu0 0
    %160 = vmatpush1.bf16.msra.mxu0 0
    %161 = vmatprep.subr.bf16.mxu0 0
    %162 = vmatpush1.bf16.msra.mxu0 0
    %163 = vmatprep.subr.bf16.mxu0 0
    %164 = vmatpush1.bf16.msra.mxu0 0
    %165 = vmatprep.subr.bf16.mxu0 0
    %166 = vmatpush1.bf16.msra.mxu0 0
    %167 = vmatprep.subr.bf16.mxu0 0
    %168 = vmatpush1.bf16.msra.mxu0 0
    %169 = vmatprep.subr.bf16.mxu0 0
    %170 = vmatpush1.bf16.msra.mxu0 0
    %171 = vmatprep.subr.bf16.mxu0 0
    %172 = vmatpush1.bf16.msra.mxu0 0
    %173 = vmatprep.subr.bf16.mxu0 0
    %174 = vmatpush1.bf16.msra.mxu0 0
    %175 = vmatprep.subr.bf16.mxu0 0
    %176 = vmatpush1.bf16.msra.mxu0 0
    %177 = vmatprep.subr.bf16.mxu0 0
    %178 = vmatpush1.bf16.msra.mxu0 0
    %179 = vmatprep.mubr.bf16.mxu0 0
    %180 = vmatmul.mubr.bf16.gmra.mrb[0].mxu0 %v145
    %v181 = vpop.f32.mrb[0].mxu0
    %v182 = vadd.f32 0.0, %v181
    %v183 = vpop.f32.mrb[0].mxu0
    %v184 = vpop.f32.mrb[0].mxu0
    %v185 = vadd.f32 0.0, %v184
    %v186 = vpop.f32.mrb[0].mxu0
    %187 = vdwg.mxu0
    %v188 = vadd.f32 %v109, %v182
    %v189 = vadd.f32 %v110, %v185
    %190 = vst.msk [vmem:[#allocation2] sm:$0xff] %vm61, %v188
    %191 = vst.msk [vmem:[#allocation2 + $0x8] sm:$0xff] %vm61, %v189
    // Predicated region
    $region34: #{tpu_custom_call.1} parent=1 // pred_check
      %p192 = pneg %p28
    $region35: #{tpu_custom_call.1} parent=1 // pred_check_branch
      %194 = sbr.rel (%p192) target = $region37
    $region36: #{tpu_custom_call.1} parent=1 // pred_region
      %v195 = vld [vmem:[#allocation2] sm:$0xff]
      %v196 = vld [vmem:[#allocation2 + $0x8] sm:$0xff]
      %v197 = vadd.f32 %v35, %v195
      %v198 = vadd.f32 %v36, %v196
      %v199 = vld [vmem:[%s4] sm:$0x1]
      %v201 = vlaneseq
      %v202 = vshrl.u32 %v201, 7
      %v203 = vsub.s32 0, %v202
      %v204 = vrot.slane %v199, %v203
      %v206 = vadd.f32 %v197, %v204
      %v207 = vadd.f32 %v198, %v204
      %v208 = vsel %vm61, %v206, 0.0
      %209 = vadd.xlane.f32.xlu0 %v208
      %v210 = vpop.xlane.xlu0 %209
      %v211 = vsel %vm61, %v207, 0.0
      %212 = vadd.xlane.f32.xlu0 %v211
      %v213 = vpop.xlane.xlu0 %212
      %v214 = vrcp.pop 32.0
      %v215 = vmul.f32 %v210, %v214
      %v216 = vmul.f32 %v213, %v214
      %v217 = vsub.f32 %v206, %v215
      %v218 = vsub.f32 %v207, %v216
      %v219 = vmul.f32 %v217, %v217
      %v220 = vmul.f32 %v218, %v218
      %v221 = vsel %vm61, %v219, 0.0
      %222 = vadd.xlane.f32.xlu0 %v221
      %v223 = vpop.xlane.xlu0 %222
      %v224 = vsel %vm61, %v220, 0.0
      %225 = vadd.xlane.f32.xlu0 %v224
      %v226 = vpop.xlane.xlu0 %225
      %v227 = vmul.f32 %v223, %v214
      %v228 = vmul.f32 %v226, %v214
      %v229 = vadd.f32 %v227, 1e-05
      %v230 = vadd.f32 %v228, 1e-05
      %v231 = vrsqrt.pop %v229
      %v232 = vrsqrt.pop %v230
      %v233 = vmul.f32 %v217, %v231
      %v234 = vmul.f32 %v218, %v232
      %v235 = vld [vmem:[%s5] sm:$0x1]
      %v237 = vlaneseq
      %v238 = vshrl.u32 %v237, 7
      %v239 = vsub.s32 0, %v238
      %v240 = vrot.slane %v235, %v239
      %v242 = vmul.f32 %v233, %v240
      %v243 = vmul.f32 %v234, %v240
      %v244 = vld [vmem:[%s6] sm:$0x1]
      %v246 = vlaneseq
      %v247 = vshrl.u32 %v246, 7
      %v248 = vsub.s32 0, %v247
      %v249 = vrot.slane %v244, %v248
      %v251 = vadd.f32 %v242, %v249
      %v252 = vadd.f32 %v243, %v249
      %253 = vst.msk [vmem:[#allocation3] sm:$0xff] %vm61, %v251
      %254 = vst.msk [vmem:[#allocation3 + $0x8] sm:$0xff] %vm61, %v252
    $region37: #{tpu_custom_call.1} parent=1 // pred_fallthru
      _
    // Predicated region
    $region38: #{tpu_custom_call.1} parent=1 // pred_check
      _
    $region39: #{tpu_custom_call.1} parent=1 // pred_check_branch
      %256 = sbr.rel (0) target = $region41
    $region40: #{tpu_custom_call.1} parent=1 // pred_region
      %s258 = ssub.s32 256, 256
      %259 = vsyncadd [#allocation4], %s258
      %s260 = sshll.u32 [#allocation3], 4
      %s261 = int_to_ptr.vmem [resolvable:$true] %s260
      %266 = dma.vmem_to_hbm [thread:$0]  %s261, 256, %s7, [#allocation4], 128, 128, 8
    $region41: #{tpu_custom_call.1} parent=1 // pred_fallthru
      _
    // Predicated region
    $region42: #{tpu_custom_call.1} parent=1 // pred_check
      _
    $region43: #{tpu_custom_call.1} parent=1 // pred_check_branch
      %268 = sbr.rel (0) target = $region45
    $region44: #{tpu_custom_call.1} parent=1 // pred_region
      %269 = dma.done [#allocation4], 256
    $region45: #{tpu_custom_call.1} parent=1 // pred_fallthru
      _
    %270 = vsyncpa [#allocation4], 1

</llo_original>
